<compile_context>
chip_gen: v6e
topology: v6e:2x2x1
jax: 0.10.0
libtpu: 0.0.40
codegen_flags: <defaults>
</compile_context>

<pallas_src>
import functools

import jax
import jax.numpy as jnp
import numpy as np
from jax.experimental import pallas as pl
from jax.experimental.pallas import tpu as pltpu


def _recall_kernel(pred_ref, target_ref, out_ref, tp_ref, pos_ref, *, thresh, eps):
    # Grid = (D tiles, N tiles); axis 1 is the reduction over the batch axis.
    n_idx = pl.program_id(1)

    @pl.when(n_idx == 0)
    def _():
        tp_ref[...] = jnp.zeros_like(tp_ref)
        pos_ref[...] = jnp.zeros_like(pos_ref)

    pred = pred_ref[...].astype(jnp.float32)      # (TN, TD)
    target = target_ref[...].astype(jnp.float32)  # (TN, TD)

    is_pos = target == 1.0
    pred_pos = pred > thresh

    # tp contribution and positive-target count for this N tile.
    tp_ref[...] += jnp.sum((pred_pos & is_pos).astype(jnp.float32),
                           axis=0, keepdims=True)
    pos_ref[...] += jnp.sum(is_pos.astype(jnp.float32),
                            axis=0, keepdims=True)

    @pl.when(n_idx == pl.num_programs(1) - 1)
    def _():
        # recall = tp / (tp + fn + eps) == tp / (pos_count + eps)
        out_ref[...] = tp_ref[...] / (pos_ref[...] + eps)


def recall(pred, target, thresh=0.5, eps=1e-5):
    assert pred.shape == target.shape, "pred/target shape mismatch"
    N = pred.shape[0]
    feat_shape = pred.shape[1:]
    D = int(np.prod(feat_shape)) if len(feat_shape) else 1

    pred2 = pred.reshape(N, D)
    target2 = target.reshape(N, D)

    # ---- lane tile (D axis): multiple of 128 when possible, else full dim ----
    if D % 128 == 0:
        TD = min(D, 1024)
        while D % TD != 0:
            TD //= 2
    else:
        TD = D

    # ---- sublane tile (N axis): ~2 MiB per input buffer, multiple of 8 ------
    itemsize = max(jnp.dtype(pred2.dtype).itemsize, jnp.dtype(target2.dtype).itemsize)
    per_buffer_bytes = 2 * 1024 * 1024
    tn = max(8, (per_buffer_bytes // (TD * itemsize)) // 8 * 8)
    if tn >= N:
        TN = N                      # full batch axis in one tile (no (8,) constraint)
        N_pad = N
    else:
        TN = tn
        N_pad = ((N + TN - 1) // TN) * TN
        if N_pad != N:
            # Zero-padding is exact for recall: padded rows have target == 0,
            # so they contribute neither to tp nor to the positive count.
            pad = N_pad - N
            pred2 = jnp.pad(pred2, ((0, pad), (0, 0)))
            target2 = jnp.pad(target2, ((0, pad), (0, 0)))

    grid = (D // TD, N_pad // TN)

    out = pl.pallas_call(
        functools.partial(_recall_kernel, thresh=float(thresh), eps=float(eps)),
        out_shape=jax.ShapeDtypeStruct((1, D), jnp.float32),
        grid=grid,
        in_specs=[
            pl.BlockSpec((TN, TD), lambda j, n: (n, j)),   # pred tile
            pl.BlockSpec((TN, TD), lambda j, n: (n, j)),   # target tile
        ],
        out_specs=pl.BlockSpec((1, TD), lambda j, n: (0, j)),
        scratch_shapes=[
            pltpu.VMEM((1, TD), jnp.float32),              # tp accumulator
            pltpu.VMEM((1, TD), jnp.float32),              # positive-count accumulator
        ],
        compiler_params=pltpu.CompilerParams(
            dimension_semantics=("parallel", "arbitrary"),
            vmem_limit_bytes=32 * 1024 * 1024,
        ),
    )(pred2, target2)

    return out.reshape(feat_shape) if len(feat_shape) else out.reshape(())


def _recall_ref(pred, target, thresh=0.5, eps=1e-5):
    pred_thresh = (pred > thresh).astype(jnp.float32)
    tp = jnp.sum(((pred_thresh == target) & (target == 1.0)).astype(jnp.float32), axis=0)
    fn = jnp.sum(((pred_thresh != target) & (target == 1.0)).astype(jnp.float32), axis=0)
    return tp / (fn + tp + eps)


if __name__ == "__main__":
    key = jax.random.PRNGKey(0)
    k_pred, k_tgt = jax.random.split(key)

    # Small shapes consistent with a segmentation-style metric: (B, C, H, W).
    B, C, H, W = 2, 4, 16, 16
    pred = jax.random.uniform(k_pred, (B, C, H, W), dtype=jnp.float32)
    target = (jax.random.uniform(k_tgt, (B, C, H, W)) > 0.5).astype(jnp.float32)

    out = recall(pred, target, thresh=0.5, eps=1e-5)
    out = jax.block_until_ready(out)

    ref = _recall_ref(pred, target, thresh=0.5, eps=1e-5)
    np.testing.assert_allclose(np.asarray(out), np.asarray(ref), rtol=1e-6, atol=1e-6)
    assert out.shape == (C, H, W)

    print("KERNEL_OK")
</pallas_src>

<mosaic_0001>
module attributes {stable_mosaic.version = 11 : i64} {
  func.func @_recall_kernel(%arg0: i32, %arg1: i32, %arg2: memref<2x1024xf32, #tpu.memory_space<vmem>>, %arg3: memref<2x1024xf32, #tpu.memory_space<vmem>>, %arg4: memref<1x1024xf32, #tpu.memory_space<vmem>>, %arg5: memref<1x1024xf32, #tpu.memory_space<vmem>>, %arg6: memref<1x1024xf32, #tpu.memory_space<vmem>>) attributes {dimension_semantics = [#tpu.dimension_semantics<parallel>, #tpu.dimension_semantics<arbitrary>], iteration_bounds = array<i64: 1, 1>, scalar_prefetch = 0 : i64, scratch_operands = 2 : i64, tpu.core_type = #tpu.core_type<tc>, window_params = [{transform_indices = @transform_0, window_bounds = array<i64: 2, 1024>}, {transform_indices = @transform_1, window_bounds = array<i64: 2, 1024>}, {transform_indices = @transform_2, window_bounds = array<i64: 1, 1024>}]} {
    %c0_i32 = arith.constant 0 : i32
    %0 = arith.cmpi eq, %arg1, %c0_i32 : i32
    %1 = arith.extui %0 : i1 to i32
    %c0_i32_0 = arith.constant 0 : i32
    %2 = arith.cmpi ne, %1, %c0_i32_0 : i32
    scf.if %2 {
      %cst_17 = arith.constant 0.000000e+00 : f32
      %27 = vector.broadcast %cst_17 : f32 to vector<1x1024xf32>
      %c0_18 = arith.constant 0 : index
      %c0_19 = arith.constant 0 : index
      %28 = vector.load %arg5[%c0_18, %c0_19] : memref<1x1024xf32, #tpu.memory_space<vmem>>, vector<1x1024xf32>
      tpu.vector_store %arg5[%c0_18, %c0_19], %27 {strides = array<i32>} : memref<1x1024xf32, #tpu.memory_space<vmem>>, vector<1x1024xf32>,
      %cst_20 = arith.constant 0.000000e+00 : f32
      %29 = vector.broadcast %cst_20 : f32 to vector<1x1024xf32>
      %c0_21 = arith.constant 0 : index
      %c0_22 = arith.constant 0 : index
      %30 = vector.load %arg6[%c0_21, %c0_22] : memref<1x1024xf32, #tpu.memory_space<vmem>>, vector<1x1024xf32>
      tpu.vector_store %arg6[%c0_21, %c0_22], %29 {strides = array<i32>} : memref<1x1024xf32, #tpu.memory_space<vmem>>, vector<1x1024xf32>,
    } else {
    }
    %c0 = arith.constant 0 : index
    %c0_1 = arith.constant 0 : index
    %3 = vector.load %arg2[%c0, %c0_1] : memref<2x1024xf32, #tpu.memory_space<vmem>>, vector<2x1024xf32>
    %c0_2 = arith.constant 0 : index
    %c0_3 = arith.constant 0 : index
    %4 = vector.load %arg3[%c0_2, %c0_3] : memref<2x1024xf32, #tpu.memory_space<vmem>>, vector<2x1024xf32>
    %cst = arith.constant 1.000000e+00 : f32
    %5 = vector.broadcast %cst : f32 to vector<2x1024xf32>
    %6 = arith.cmpf oeq, %4, %5 : vector<2x1024xf32>
    %cst_4 = arith.constant 5.000000e-01 : f32
    %7 = vector.broadcast %cst_4 : f32 to vector<2x1024xf32>
    %8 = arith.cmpf ogt, %3, %7 : vector<2x1024xf32>
    %c0_5 = arith.constant 0 : index
    %c0_6 = arith.constant 0 : index
    %9 = vector.load %arg5[%c0_5, %c0_6] : memref<1x1024xf32, #tpu.memory_space<vmem>>, vector<1x1024xf32>
    %10 = arith.andi %8, %6 : vector<2x1024xi1>
    %11 = arith.extui %10 : vector<2x1024xi1> to vector<2x1024xi32>
    %12 = arith.sitofp %11 : vector<2x1024xi32> to vector<2x1024xf32>
    %cst_7 = arith.constant dense<0.000000e+00> : vector<1024xf32>
    %13 = vector.multi_reduction <add>, %12, %cst_7 [0] : vector<2x1024xf32> to vector<1024xf32>
    %14 = vector.shape_cast %13 : vector<1024xf32> to vector<1x1024xf32>
    %15 = arith.addf %9, %14 : vector<1x1024xf32>
    %c0_8 = arith.constant 0 : index
    %c0_9 = arith.constant 0 : index
    %16 = vector.load %arg5[%c0_8, %c0_9] : memref<1x1024xf32, #tpu.memory_space<vmem>>, vector<1x1024xf32>
    tpu.vector_store %arg5[%c0_8, %c0_9], %15 {strides = array<i32>} : memref<1x1024xf32, #tpu.memory_space<vmem>>, vector<1x1024xf32>,
    %c0_10 = arith.constant 0 : index
    %c0_11 = arith.constant 0 : index
    %17 = vector.load %arg6[%c0_10, %c0_11] : memref<1x1024xf32, #tpu.memory_space<vmem>>, vector<1x1024xf32>
    %18 = arith.extui %6 : vector<2x1024xi1> to vector<2x1024xi32>
    %19 = arith.sitofp %18 : vector<2x1024xi32> to vector<2x1024xf32>
    %cst_12 = arith.constant dense<0.000000e+00> : vector<1024xf32>
    %20 = vector.multi_reduction <add>, %19, %cst_12 [0] : vector<2x1024xf32> to vector<1024xf32>
    %21 = vector.shape_cast %20 : vector<1024xf32> to vector<1x1024xf32>
    %22 = arith.addf %17, %21 : vector<1x1024xf32>
    %c0_13 = arith.constant 0 : index
    %c0_14 = arith.constant 0 : index
    %23 = vector.load %arg6[%c0_13, %c0_14] : memref<1x1024xf32, #tpu.memory_space<vmem>>, vector<1x1024xf32>
    tpu.vector_store %arg6[%c0_13, %c0_14], %22 {strides = array<i32>} : memref<1x1024xf32, #tpu.memory_space<vmem>>, vector<1x1024xf32>,
    %c0_i32_15 = arith.constant 0 : i32
    %24 = arith.cmpi eq, %arg1, %c0_i32_15 : i32
    %25 = arith.extui %24 : i1 to i32
    %c0_i32_16 = arith.constant 0 : i32
    %26 = arith.cmpi ne, %25, %c0_i32_16 : i32
    scf.if %26 {
      %c0_17 = arith.constant 0 : index
      %c0_18 = arith.constant 0 : index
      %27 = vector.load %arg5[%c0_17, %c0_18] : memref<1x1024xf32, #tpu.memory_space<vmem>>, vector<1x1024xf32>
      %c0_19 = arith.constant 0 : index
      %c0_20 = arith.constant 0 : index
      %28 = vector.load %arg6[%c0_19, %c0_20] : memref<1x1024xf32, #tpu.memory_space<vmem>>, vector<1x1024xf32>
      %cst_21 = arith.constant 9.99999974E-6 : f32
      %29 = vector.broadcast %cst_21 : f32 to vector<1x1024xf32>
      %30 = arith.addf %28, %29 : vector<1x1024xf32>
      %31 = arith.divf %27, %30 : vector<1x1024xf32>
      %c0_22 = arith.constant 0 : index
      %c0_23 = arith.constant 0 : index
      %32 = vector.load %arg4[%c0_22, %c0_23] : memref<1x1024xf32, #tpu.memory_space<vmem>>, vector<1x1024xf32>
      tpu.vector_store %arg4[%c0_22, %c0_23], %31 {strides = array<i32>} : memref<1x1024xf32, #tpu.memory_space<vmem>>, vector<1x1024xf32>,
    } else {
    }
    return
  }
  func.func @transform_0(%arg0: i32, %arg1: i32) -> (i32, i32) {
    %c0_i32 = arith.constant 0 : i32
    return %arg1, %arg0 : i32, i32
  }
  func.func @transform_1(%arg0: i32, %arg1: i32) -> (i32, i32) {
    %c0_i32 = arith.constant 0 : i32
    return %arg1, %arg0 : i32, i32
  }
  func.func @transform_2(%arg0: i32, %arg1: i32) -> (i32, i32) {
    %c0_i32 = arith.constant 0 : i32
    %c0_i32_0 = arith.constant 0 : i32
    return %c0_i32, %arg0 : i32, i32
  }
}

</mosaic_0001>

<llo_original>
// kernel: tpu_custom_call.1
$region0: #{tpu_custom_call.1}
  #allocation0 [shape = 'u32[]', space=smem, size = 0x4, offset = 0x4, fixed_abs, tag = 'smem constant byte address 0x4 - core index']
  #allocation1 [shape = 'u32[144,128]{1,0:T(1,128)}', space=vmem, size = 0x12000, scoped, tag = 'internal scratch']
  #allocation2 [shape = 'f32[1,1024]{1,0:T(1,128)}', space=vmem, size = 0x1000, scoped, tag = 'scratch operand']
  #allocation3 [shape = 'f32[1,1024]{1,0:T(1,128)}', space=vmem, size = 0x1000, scoped, tag = 'scratch operand']
  %s0 = inlined_call_operand.hbm [shape: f32[2,1024], index: 0, kind: input, shape index: {}]
  %s1 = inlined_call_operand.hbm [shape: f32[2,1024], index: 1, kind: input, shape index: {}]
  %s2 = inlined_call_operand.hbm [shape: f32[1,1024], index: 2, kind: output, shape index: {}]
  %s3 = sld [smem:[#allocation0]]
  $region34: #{tpu_custom_call.1} parent=0
    _
  %s5 = ssub.s32 1, %s3
  %s6 = scalar_select 0, %s5, %s3
  $region1: #{tpu_custom_call.1} parent=0
    #allocation4 [shape = 'u8[8192]{0}', space=vmem, size = 0x2000, scoped, tag = 'input window, operand 0, single buffered']
    #allocation5 [shape = 's32[1]{0}', space=sflag, size = 0x4, scoped, tag = 'scoped memory for tpu_custom_call.1']
    #allocation6 [shape = 's32[1]{0}', space=sflag, size = 0x4, scoped, tag = 'scoped memory for tpu_custom_call.1']
    #allocation7 [shape = 'u8[8192]{0}', space=vmem, size = 0x2000, scoped, tag = 'input window, operand 1, single buffered']
    #allocation8 [shape = 's32[1]{0}', space=sflag, size = 0x4, scoped, tag = 'scoped memory for tpu_custom_call.1']
    #allocation9 [shape = 'u8[4096]{0}', space=vmem, size = 0x1000, scoped, tag = 'output window, operand 0, single buffered']
    %7 = vsyncpa [#allocation5], 0
    %8 = vsyncpa [#allocation8], 0
    %9 = vsyncpa [#allocation6], 0
    // Predicated region
    $region2: #{tpu_custom_call.1} parent=1 // pred_check
      _
    $region3: #{tpu_custom_call.1} parent=1 // pred_check_branch
      %11 = sbr.rel (0) target = $region5
    $region4: #{tpu_custom_call.1} parent=1 // pred_region
      %s13 = ssub.s32 256, 256
      %14 = vsyncadd [#allocation5], %s13
      %s16 = sshll.u32 [#allocation4], 4
      %s17 = int_to_ptr.vmem [resolvable:$true] %s16
      %19 = dma.hbm_to_vmem [thread:$0]  %s0, 256, %s17, [#allocation5]
    $region5: #{tpu_custom_call.1} parent=1 // pred_fallthru
      _
    // Predicated region
    $region6: #{tpu_custom_call.1} parent=1 // pred_check
      _
    $region7: #{tpu_custom_call.1} parent=1 // pred_check_branch
      %21 = sbr.rel (0) target = $region9
    $region8: #{tpu_custom_call.1} parent=1 // pred_region
      %s23 = ssub.s32 256, 256
      %24 = vsyncadd [#allocation8], %s23
      %s26 = sshll.u32 [#allocation7], 4
      %s27 = int_to_ptr.vmem [resolvable:$true] %s26
      %29 = dma.hbm_to_vmem [thread:$0]  %s1, 256, %s27, [#allocation8]
    $region9: #{tpu_custom_call.1} parent=1 // pred_fallthru
      _
    // Predicated region
    $region10: #{tpu_custom_call.1} parent=1 // pred_check
      _
    $region11: #{tpu_custom_call.1} parent=1 // pred_check_branch
      %31 = sbr.rel (0) target = $region13
    $region12: #{tpu_custom_call.1} parent=1 // pred_region
      %32 = dma.done [#allocation5], 256
    $region13: #{tpu_custom_call.1} parent=1 // pred_fallthru
      _
    // Predicated region
    $region14: #{tpu_custom_call.1} parent=1 // pred_check
      _
    $region15: #{tpu_custom_call.1} parent=1 // pred_check_branch
      %34 = sbr.rel (0) target = $region17
    $region16: #{tpu_custom_call.1} parent=1 // pred_region
      %35 = dma.done [#allocation8], 256
    $region17: #{tpu_custom_call.1} parent=1 // pred_fallthru
      _
    %p36 = scmp.eq.s32.totalorder 0, 0
    // Predicated region
    $region18: #{tpu_custom_call.1} parent=1 // pred_check
      %p37 = pneg %p36
    $region19: #{tpu_custom_call.1} parent=1 // pred_check_branch
      %39 = sbr.rel (%p37) target = $region21
    $region20: #{tpu_custom_call.1} parent=1 // pred_region
      %40 = vst [vmem:[#allocation2] sm:$0xff] 0.0
      %41 = vst [vmem:[#allocation3] sm:$0xff] 0.0
    $region21: #{tpu_custom_call.1} parent=1 // pred_fallthru
      _
    %v42 = vld [vmem:[#allocation4] sm:$0xff]
    %v43 = vld [vmem:[#allocation4 + $0x8] sm:$0xff]
    %v44 = vld [vmem:[#allocation7] sm:$0xff]
    %v45 = vld [vmem:[#allocation7 + $0x8] sm:$0xff]
    %vm46 = vcmp.eq.f32.partialorder %v44, 1.0
    %vm47 = vcmp.eq.f32.partialorder %v45, 1.0
    %vm48 = vcmp.gt.f32.partialorder %v42, 0.5
    %vm49 = vcmp.gt.f32.partialorder %v43, 0.5
    %v50 = vld [vmem:[#allocation2] sm:$0xff]
    %vm51 = vmand %vm48, %vm46
    %vm52 = vmand %vm49, %vm47
    %v53 = vsel %vm51, 1, 0
    %v54 = vsel %vm52, 1, 0
    %v55 = vcvt.s32.f32 %v53
    %v56 = vcvt.s32.f32 %v54
    %v59 = vcombine.high %v55, %v55
    %v61 = vunpack.c.l.s4 1983009808
    %v62 = vunpack.c.0.s8 %v61
    %v63 = vlaneseq
    %v64 = vshrl.u32 %v63, 7
    %v65 = vsub.s32 %v62, %v64
    %v66 = vrot.slane %v55, %v65
    %v68 = vunpack.c.l.s4 1983009808
    %v69 = vunpack.c.0.s8 %v68
    %v70 = vlaneseq
    %v71 = vshrl.u32 %v70, 7
    %v72 = vsub.s32 %v69, %v71
    %v73 = vrot.slane %v59, %v72
    %v74 = vcombine.high %v66, %v66
    %v75 = vcombine.high %v73, %v73
    %v76 = vcombine.high %v56, %v56
    %v78 = vunpack.c.l.s4 1983009808
    %v79 = vunpack.c.0.s8 %v78
    %v80 = vlaneseq
    %v81 = vshrl.u32 %v80, 7
    %v82 = vsub.s32 %v79, %v81
    %v83 = vrot.slane %v56, %v82
    %v85 = vunpack.c.l.s4 1983009808
    %v86 = vunpack.c.0.s8 %v85
    %v87 = vlaneseq
    %v88 = vshrl.u32 %v87, 7
    %v89 = vsub.s32 %v86, %v88
    %v90 = vrot.slane %v76, %v89
    %v91 = vcombine.high %v83, %v83
    %v92 = vcombine.high %v90, %v90
    %vm101 = vcmask 1041408
    %v102 = vsel %vm101, %v66, 0.0
    %v103 = vrot.slane %v102, 4
    %v104 = vadd.f32 %v102, %v103
    %v105 = vrot.slane %v104, 2
    %v106 = vadd.f32 %v104, %v105
    %v107 = vrot.slane %v106, 1
    %v108 = vadd.f32 %v106, %v107
    %v109 = vsel %vm101, %v74, 0.0
    %v110 = vrot.slane %v109, 4
    %v111 = vadd.f32 %v109, %v110
    %v112 = vrot.slane %v111, 2
    %v113 = vadd.f32 %v111, %v112
    %v114 = vrot.slane %v113, 1
    %v115 = vadd.f32 %v113, %v114
    %v116 = vsel %vm101, %v73, 0.0
    %v117 = vrot.slane %v116, 4
    %v118 = vadd.f32 %v116, %v117
    %v119 = vrot.slane %v118, 2
    %v120 = vadd.f32 %v118, %v119
    %v121 = vrot.slane %v120, 1
    %v122 = vadd.f32 %v120, %v121
    %v123 = vsel %vm101, %v75, 0.0
    %v124 = vrot.slane %v123, 4
    %v125 = vadd.f32 %v123, %v124
    %v126 = vrot.slane %v125, 2
    %v127 = vadd.f32 %v125, %v126
    %v128 = vrot.slane %v127, 1
    %v129 = vadd.f32 %v127, %v128
    %v130 = vsel %vm101, %v83, 0.0
    %v131 = vrot.slane %v130, 4
    %v132 = vadd.f32 %v130, %v131
    %v133 = vrot.slane %v132, 2
    %v134 = vadd.f32 %v132, %v133
    %v135 = vrot.slane %v134, 1
    %v136 = vadd.f32 %v134, %v135
    %v137 = vsel %vm101, %v91, 0.0
    %v138 = vrot.slane %v137, 4
    %v139 = vadd.f32 %v137, %v138
    %v140 = vrot.slane %v139, 2
    %v141 = vadd.f32 %v139, %v140
    %v142 = vrot.slane %v141, 1
    %v143 = vadd.f32 %v141, %v142
    %v144 = vsel %vm101, %v90, 0.0
    %v145 = vrot.slane %v144, 4
    %v146 = vadd.f32 %v144, %v145
    %v147 = vrot.slane %v146, 2
    %v148 = vadd.f32 %v146, %v147
    %v149 = vrot.slane %v148, 1
    %v150 = vadd.f32 %v148, %v149
    %v151 = vsel %vm101, %v92, 0.0
    %v152 = vrot.slane %v151, 4
    %v153 = vadd.f32 %v151, %v152
    %v154 = vrot.slane %v153, 2
    %v155 = vadd.f32 %v153, %v154
    %v156 = vrot.slane %v155, 1
    %v157 = vadd.f32 %v155, %v156
    %v166 = vcombine.low %v108, %v115
    %v167 = vcombine.low %v122, %v129
    %v168 = vcombine.low %v136, %v143
    %v169 = vcombine.low %v150, %v157
    %v171 = vunpack.c.l.s4 1966171168
    %v172 = vunpack.c.0.s8 %v171
    %v173 = vlaneseq
    %v174 = vshrl.u32 %v173, 7
    %v175 = vsub.s32 %v172, %v174
    %v176 = vrot.slane %v166, %v175
    %v178 = vunpack.c.l.s4 1966171168
    %v179 = vunpack.c.0.s8 %v178
    %v180 = vlaneseq
    %v181 = vshrl.u32 %v180, 7
    %v182 = vsub.s32 %v179, %v181
    %v183 = vrot.slane %v167, %v182
    %v185 = vunpack.c.l.s4 1966171168
    %v186 = vunpack.c.0.s8 %v185
    %v187 = vlaneseq
    %v188 = vshrl.u32 %v187, 7
    %v189 = vsub.s32 %v186, %v188
    %v190 = vrot.slane %v168, %v189
    %v192 = vunpack.c.l.s4 1966171168
    %v193 = vunpack.c.0.s8 %v192
    %v194 = vlaneseq
    %v195 = vshrl.u32 %v194, 7
    %v196 = vsub.s32 %v193, %v195
    %v197 = vrot.slane %v169, %v196
    %v198 = vcombine.low %v176, %v183
    %v199 = vcombine.low %v190, %v197
    %v201 = vunpack.c.l.s4 1966171168
    %v202 = vunpack.c.0.s8 %v201
    %v203 = vlaneseq
    %v204 = vshrl.u32 %v203, 7
    %v205 = vsub.s32 %v202, %v204
    %v206 = vrot.slane %v198, %v205
    %v208 = vunpack.c.l.s4 1966171168
    %v209 = vunpack.c.0.s8 %v208
    %v210 = vlaneseq
    %v211 = vshrl.u32 %v210, 7
    %v212 = vsub.s32 %v209, %v211
    %v213 = vrot.slane %v199, %v212
    %v214 = vcombine.low %v206, %v213
    %v216 = vadd.f32 %v50, %v214
    %217 = vst [vmem:[#allocation2] sm:$0xff] %v216
    %v218 = vld [vmem:[#allocation3] sm:$0xff]
    %v219 = vsel %vm46, 1, 0
    %v220 = vsel %vm47, 1, 0
    %v221 = vcvt.s32.f32 %v219
    %v222 = vcvt.s32.f32 %v220
    %v225 = vcombine.high %v221, %v221
    %v227 = vunpack.c.l.s4 1983009808
    %v228 = vunpack.c.0.s8 %v227
    %v229 = vlaneseq
    %v230 = vshrl.u32 %v229, 7
    %v231 = vsub.s32 %v228, %v230
    %v232 = vrot.slane %v221, %v231
    %v234 = vunpack.c.l.s4 1983009808
    %v235 = vunpack.c.0.s8 %v234
    %v236 = vlaneseq
    %v237 = vshrl.u32 %v236, 7
    %v238 = vsub.s32 %v235, %v237
    %v239 = vrot.slane %v225, %v238
    %v240 = vcombine.high %v232, %v232
    %v241 = vcombine.high %v239, %v239
    %v242 = vcombine.high %v222, %v222
    %v244 = vunpack.c.l.s4 1983009808
    %v245 = vunpack.c.0.s8 %v244
    %v246 = vlaneseq
    %v247 = vshrl.u32 %v246, 7
    %v248 = vsub.s32 %v245, %v247
    %v249 = vrot.slane %v222, %v248
    %v251 = vunpack.c.l.s4 1983009808
    %v252 = vunpack.c.0.s8 %v251
    %v253 = vlaneseq
    %v254 = vshrl.u32 %v253, 7
    %v255 = vsub.s32 %v252, %v254
    %v256 = vrot.slane %v242, %v255
    %v257 = vcombine.high %v249, %v249
    %v258 = vcombine.high %v256, %v256
    %v267 = vsel %vm101, %v232, 0.0
    %v268 = vrot.slane %v267, 4
    %v269 = vadd.f32 %v267, %v268
    %v270 = vrot.slane %v269, 2
    %v271 = vadd.f32 %v269, %v270
    %v272 = vrot.slane %v271, 1
    %v273 = vadd.f32 %v271, %v272
    %v274 = vsel %vm101, %v240, 0.0
    %v275 = vrot.slane %v274, 4
    %v276 = vadd.f32 %v274, %v275
    %v277 = vrot.slane %v276, 2
    %v278 = vadd.f32 %v276, %v277
    %v279 = vrot.slane %v278, 1
    %v280 = vadd.f32 %v278, %v279
    %v281 = vsel %vm101, %v239, 0.0
    %v282 = vrot.slane %v281, 4
    %v283 = vadd.f32 %v281, %v282
    %v284 = vrot.slane %v283, 2
    %v285 = vadd.f32 %v283, %v284
    %v286 = vrot.slane %v285, 1
    %v287 = vadd.f32 %v285, %v286
    %v288 = vsel %vm101, %v241, 0.0
    %v289 = vrot.slane %v288, 4
    %v290 = vadd.f32 %v288, %v289
    %v291 = vrot.slane %v290, 2
    %v292 = vadd.f32 %v290, %v291
    %v293 = vrot.slane %v292, 1
    %v294 = vadd.f32 %v292, %v293
    %v295 = vsel %vm101, %v249, 0.0
    %v296 = vrot.slane %v295, 4
    %v297 = vadd.f32 %v295, %v296
    %v298 = vrot.slane %v297, 2
    %v299 = vadd.f32 %v297, %v298
    %v300 = vrot.slane %v299, 1
    %v301 = vadd.f32 %v299, %v300
    %v302 = vsel %vm101, %v257, 0.0
    %v303 = vrot.slane %v302, 4
    %v304 = vadd.f32 %v302, %v303
    %v305 = vrot.slane %v304, 2
    %v306 = vadd.f32 %v304, %v305
    %v307 = vrot.slane %v306, 1
    %v308 = vadd.f32 %v306, %v307
    %v309 = vsel %vm101, %v256, 0.0
    %v310 = vrot.slane %v309, 4
    %v311 = vadd.f32 %v309, %v310
    %v312 = vrot.slane %v311, 2
    %v313 = vadd.f32 %v311, %v312
    %v314 = vrot.slane %v313, 1
    %v315 = vadd.f32 %v313, %v314
    %v316 = vsel %vm101, %v258, 0.0
    %v317 = vrot.slane %v316, 4
    %v318 = vadd.f32 %v316, %v317
    %v319 = vrot.slane %v318, 2
    %v320 = vadd.f32 %v318, %v319
    %v321 = vrot.slane %v320, 1
    %v322 = vadd.f32 %v320, %v321
    %v331 = vcombine.low %v273, %v280
    %v332 = vcombine.low %v287, %v294
    %v333 = vcombine.low %v301, %v308
    %v334 = vcombine.low %v315, %v322
    %v336 = vunpack.c.l.s4 1966171168
    %v337 = vunpack.c.0.s8 %v336
    %v338 = vlaneseq
    %v339 = vshrl.u32 %v338, 7
    %v340 = vsub.s32 %v337, %v339
    %v341 = vrot.slane %v331, %v340
    %v343 = vunpack.c.l.s4 1966171168
    %v344 = vunpack.c.0.s8 %v343
    %v345 = vlaneseq
    %v346 = vshrl.u32 %v345, 7
    %v347 = vsub.s32 %v344, %v346
    %v348 = vrot.slane %v332, %v347
    %v350 = vunpack.c.l.s4 1966171168
    %v351 = vunpack.c.0.s8 %v350
    %v352 = vlaneseq
    %v353 = vshrl.u32 %v352, 7
    %v354 = vsub.s32 %v351, %v353
    %v355 = vrot.slane %v333, %v354
    %v357 = vunpack.c.l.s4 1966171168
    %v358 = vunpack.c.0.s8 %v357
    %v359 = vlaneseq
    %v360 = vshrl.u32 %v359, 7
    %v361 = vsub.s32 %v358, %v360
    %v362 = vrot.slane %v334, %v361
    %v363 = vcombine.low %v341, %v348
    %v364 = vcombine.low %v355, %v362
    %v366 = vunpack.c.l.s4 1966171168
    %v367 = vunpack.c.0.s8 %v366
    %v368 = vlaneseq
    %v369 = vshrl.u32 %v368, 7
    %v370 = vsub.s32 %v367, %v369
    %v371 = vrot.slane %v363, %v370
    %v373 = vunpack.c.l.s4 1966171168
    %v374 = vunpack.c.0.s8 %v373
    %v375 = vlaneseq
    %v376 = vshrl.u32 %v375, 7
    %v377 = vsub.s32 %v374, %v376
    %v378 = vrot.slane %v364, %v377
    %v379 = vcombine.low %v371, %v378
    %v381 = vadd.f32 %v218, %v379
    %382 = vst [vmem:[#allocation3] sm:$0xff] %v381
    // Predicated region
    $region22: #{tpu_custom_call.1} parent=1 // pred_check
      %p383 = pneg %p36
    $region23: #{tpu_custom_call.1} parent=1 // pred_check_branch
      %385 = sbr.rel (%p383) target = $region25
    $region24: #{tpu_custom_call.1} parent=1 // pred_region
      %v386 = vld [vmem:[#allocation2] sm:$0xff]
      %v387 = vld [vmem:[#allocation3] sm:$0xff]
      %v388 = vadd.f32 %v387, 1e-05
      %v389 = vrcp.pop %v388
      %v390 = vmul.f32 %v386, %v389
      %391 = vst [vmem:[#allocation9] sm:$0xff] %v390
    $region25: #{tpu_custom_call.1} parent=1 // pred_fallthru
      _
    // Predicated region
    $region26: #{tpu_custom_call.1} parent=1 // pred_check
      _
    $region27: #{tpu_custom_call.1} parent=1 // pred_check_branch
      %393 = sbr.rel (0) target = $region29
    $region28: #{tpu_custom_call.1} parent=1 // pred_region
      %s395 = ssub.s32 128, 128
      %396 = vsyncadd [#allocation6], %s395
      %s398 = sshll.u32 [#allocation9], 4
      %s399 = int_to_ptr.vmem [resolvable:$true] %s398
      %401 = dma.vmem_to_hbm [thread:$0]  %s399, 128, %s2, [#allocation6]
    $region29: #{tpu_custom_call.1} parent=1 // pred_fallthru
      _
    // Predicated region
    $region30: #{tpu_custom_call.1} parent=1 // pred_check
      _
    $region31: #{tpu_custom_call.1} parent=1 // pred_check_branch
      %403 = sbr.rel (0) target = $region33
    $region32: #{tpu_custom_call.1} parent=1 // pred_region
      %404 = dma.done [#allocation6], 128
    $region33: #{tpu_custom_call.1} parent=1 // pred_fallthru
      _
    %405 = vsyncpa [#allocation5], 1
    %406 = vsyncpa [#allocation8], 1
    %407 = vsyncpa [#allocation6], 1

</llo_original>
